<compile_context>
chip_gen: v5e
topology: v5e:2x2
jax: 0.10.0
libtpu: 0.0.40
codegen_flags: <defaults>
</compile_context>

<pallas_src>
import functools

import jax
import jax.numpy as jnp
from jax.experimental import pallas as pl
from jax.experimental.pallas import tpu as pltpu

_LANE = 128
_NEG_BIG = -1e30  # bias for padded class columns -> exp() underflows to 0


def _round_up(v, m):
    return ((v + m - 1) // m) * m


def _pass1_kernel(x_ref, w1_ref, u_ref, minp_ref, maxp_ref, *, num_valid):
    """Single streaming pass over x: u = x_bf16 @ W1 and per-tile min/max."""
    i = pl.program_id(0)
    tb = x_ref.shape[0]
    x = x_ref[...]                                                # (TB, D)

    # Unnormalized first matmul (normalization is folded into pass 2).
    u_ref[...] = jnp.dot(x.astype(jnp.bfloat16), w1_ref[...],
                         preferred_element_type=jnp.float32)      # (TB, Hp) f32

    # Per-row min/max (XLU lane reduce), then select-mask the out-of-batch rows
    # of a ragged last tile before reducing to a per-tile scalar.
    xf = x.astype(jnp.float32)
    row = jax.lax.broadcasted_iota(jnp.int32, (tb, 1), 0) + i * tb
    valid = row < num_valid
    rmin = jnp.where(valid, jnp.min(xf, axis=-1, keepdims=True), jnp.inf)
    rmax = jnp.where(valid, jnp.max(xf, axis=-1, keepdims=True), -jnp.inf)
    minp_ref[...] = jnp.min(rmin).reshape(1, 1, 1)
    maxp_ref[...] = jnp.max(rmax).reshape(1, 1, 1)


def _pass2_kernel(scale_ref, labels_ref, u_ref, eb1_ref, w2_ref, b2_ref,
                  preds_ref, lossp_ref, *, num_valid, negative_slope=0.01):
    """Over the (B, Hp) activations: folded norm, LeakyReLU, layer 2, CE."""
    i = pl.program_id(0)
    tb = u_ref.shape[0]
    scale = scale_ref[0]

    # Hidden layer with the min/max normalization folded in:
    #   h = leaky_relu(scale * (x @ W1) + (shift * colsum(W1) + b1))
    h = u_ref[...] * scale + eb1_ref[...]                         # (TB, Hp) f32
    h = jnp.where(h >= 0.0, h, negative_slope * h)

    # Output layer (padded class columns carry a -1e30 bias).
    preds = jnp.dot(h.astype(jnp.bfloat16), w2_ref[...],
                    preferred_element_type=jnp.float32) + b2_ref[...]
    preds_ref[...] = preds                                        # (TB, Cp) f32

    # Cross entropy (sum of NLL over the valid rows of this tile), stable LSE.
    m = jnp.max(preds, axis=-1, keepdims=True)                    # (TB, 1)
    lse = m + jnp.log(jnp.sum(jnp.exp(preds - m), axis=-1, keepdims=True))
    cls = jax.lax.broadcasted_iota(jnp.int32, preds.shape, 1)     # (TB, Cp)
    picked = jnp.sum(jnp.where(cls == labels_ref[...], preds, 0.0),
                     axis=-1, keepdims=True)                      # (TB, 1)
    row = jax.lax.broadcasted_iota(jnp.int32, (tb, 1), 0) + i * tb
    nll = jnp.where(row < num_valid, lse - picked, 0.0)           # select mask
    lossp_ref[...] = jnp.sum(nll).reshape(1, 1, 1)


def label_learner_forward(inputs, labels, kparams):
    """inputs: (B, C, H, W) (NCHW), labels: (B,) int. kparams from prepare_params."""
    num_classes = kparams["num_classes"]
    w1, b1 = kparams["w1"], kparams["b1"]
    w2, b2 = kparams["w2"], kparams["b2"]
    colsum_w1 = kparams["colsum_w1"]
    D, Hp = w1.shape
    Cp = w2.shape[1]

    B = inputs.shape[0]
    # Stream x in its native dtype (f32 here); the bf16 cast happens inside the
    # kernel so x is read from HBM exactly once.  (If the caller already holds
    # bf16 activations, the per-step DMA halves automatically.)
    x_flat = inputs.reshape(B, -1)
    assert x_flat.shape[1] == D
    labels2d = labels.astype(jnp.int32).reshape(B, 1)

    # Batch tile: multiple of 8, capped at 1024 and by a ~16 MiB x double-buffer
    # (keeps total VMEM well under v7x's 64 MiB physical capacity).
    bytes_per_row = D * x_flat.dtype.itemsize
    rows_fit = max(8, ((16 * 1024 * 1024) // (2 * bytes_per_row)) // 8 * 8)
    TB = int(min(_round_up(B, 8), 1024, rows_fit))
    G = pl.cdiv(B, TB)        # ragged last tile handled in-kernel, no pad copy

    cparams = pltpu.CompilerParams(
        dimension_semantics=("parallel",),      # all per-tile outputs independent
        vmem_limit_bytes=48 * 1024 * 1024,      # v5e's 16 MiB default is too small at TB=1024
    )

    # ---- Pass 1: single read of x -> u = x_bf16 @ W1 plus min/max partials.
    pass1 = functools.partial(_pass1_kernel, num_valid=B)
    u, minp, maxp = pl.pallas_call(
        pass1,
        grid=(G,),
        in_specs=[
            pl.BlockSpec((TB, D), lambda i: (i, 0)),           # x tile
            pl.BlockSpec((D, Hp), lambda i: (0, 0)),           # w1 (resident)
        ],
        out_specs=(
            pl.BlockSpec((TB, Hp), lambda i: (i, 0)),          # u tile
            pl.BlockSpec((1, 1, 1), lambda i: (i, 0, 0)),      # per-tile min
            pl.BlockSpec((1, 1, 1), lambda i: (i, 0, 0)),      # per-tile max
        ),
        out_shape=(
            jax.ShapeDtypeStruct((B, Hp), jnp.float32),
            jax.ShapeDtypeStruct((G, 1, 1), jnp.float32),
            jax.ShapeDtypeStruct((G, 1, 1), jnp.float32),
        ),
        compiler_params=cparams,
    )(x_flat, w1)

    # Tiny reductions + algebraic fold of the normalization into layer 1's bias:
    #   xn = x*scale + shift  =>  xn @ W1 = scale*(x @ W1) + shift*(ones @ W1)
    # (x_max == x_min yields inf/nan, matching the PyTorch module's behavior.)
    x_min = jnp.min(minp)
    x_max = jnp.max(maxp)
    scale = 1.0 / (x_max - x_min)
    shift = -x_min * scale
    eff_b1 = (shift * colsum_w1 + b1).astype(jnp.float32)         # (1, Hp)
    scale_smem = scale.reshape(1).astype(jnp.float32)             # (1,) -> SMEM

    # ---- Pass 2: over the 8x smaller (B, Hp) pre-activations.
    pass2 = functools.partial(_pass2_kernel, num_valid=B)
    preds_pad, lossp = pl.pallas_call(
        pass2,
        grid=(G,),
        in_specs=[
            pl.BlockSpec(memory_space=pltpu.MemorySpace.SMEM),   # scale (1,)
            pl.BlockSpec((TB, 1), lambda i: (i, 0)),             # labels
            pl.BlockSpec((TB, Hp), lambda i: (i, 0)),            # u tile
            pl.BlockSpec((1, Hp), lambda i: (0, 0)),             # folded bias 1
            pl.BlockSpec((Hp, Cp), lambda i: (0, 0)),            # w2 (resident)
            pl.BlockSpec((1, Cp), lambda i: (0, 0)),             # b2
        ],
        out_specs=(
            pl.BlockSpec((TB, Cp), lambda i: (i, 0)),            # preds tile
            pl.BlockSpec((1, 1, 1), lambda i: (i, 0, 0)),        # per-tile loss
        ),
        out_shape=(
            jax.ShapeDtypeStruct((B, Cp), jnp.float32),
            jax.ShapeDtypeStruct((G, 1, 1), jnp.float32),
        ),
        compiler_params=cparams,
    )(scale_smem, labels2d, u, eff_b1, w2, b2)

    loss = jnp.sum(lossp) * (1.0 / B)                             # mean over batch
    return loss, preds_pad[:, :num_classes]


def init_params(key, input_size, hidden_units, output_units):
    """Xavier truncated-normal weights, zero biases (logical, f32 shapes)."""
    k1, k2 = jax.random.split(key)

    def xavier_trunc(k, fan_in, fan_out):
        std = jnp.sqrt(2.0 / (fan_in + fan_out))
        return (jax.random.truncated_normal(k, -2.0, 2.0, (fan_in, fan_out),
                                            dtype=jnp.float32) * std)

    return {
        "w1": xavier_trunc(k1, input_size, hidden_units),
        "b1": jnp.zeros((1, hidden_units), jnp.float32),
        "w2": xavier_trunc(k2, hidden_units, output_units),
        "b2": jnp.zeros((1, output_units), jnp.float32),
    }


def prepare_params(params):
    """Pad hidden/class dims to multiples of 128, cast weights to bf16, and
    precompute colsum(W1) used by the folded min/max normalization."""
    w1 = params["w1"].astype(jnp.float32)
    b1 = params["b1"].astype(jnp.float32)
    w2 = params["w2"].astype(jnp.float32)
    b2 = params["b2"].astype(jnp.float32)
    D, Hu = w1.shape
    _, Co = w2.shape
    Hp = _round_up(Hu, _LANE)
    Cp = _round_up(Co, _LANE)

    w1p = jnp.zeros((D, Hp), jnp.float32).at[:, :Hu].set(w1).astype(jnp.bfloat16)
    b1p = jnp.zeros((1, Hp), jnp.float32).at[:, :Hu].set(b1)
    w2p = jnp.zeros((Hp, Cp), jnp.float32).at[:Hu, :Co].set(w2).astype(jnp.bfloat16)
    b2p = jnp.full((1, Cp), _NEG_BIG, jnp.float32).at[:, :Co].set(b2)
    colsum_w1 = jnp.sum(w1p.astype(jnp.float32), axis=0, keepdims=True)   # (1, Hp)
    return {"w1": w1p, "b1": b1p, "w2": w2p, "b2": b2p,
            "colsum_w1": colsum_w1, "num_classes": int(Co)}


def reference_forward_matched(inputs, labels, kparams):
    """Pure-JAX reference mirroring the kernel's exact (folded, bf16) numerics."""
    B = inputs.shape[0]
    x = inputs.reshape(B, -1)
    xf = x.astype(jnp.float32)
    x_min, x_max = jnp.min(xf), jnp.max(xf)
    scale = 1.0 / (x_max - x_min)
    shift = -x_min * scale
    u = jnp.dot(x.astype(jnp.bfloat16), kparams["w1"],
                preferred_element_type=jnp.float32)
    h = u * scale + (shift * kparams["colsum_w1"] + kparams["b1"])
    h = jnp.where(h >= 0.0, h, 0.01 * h)
    preds = jnp.dot(h.astype(jnp.bfloat16), kparams["w2"],
                    preferred_element_type=jnp.float32) + kparams["b2"]
    m = jnp.max(preds, axis=-1, keepdims=True)
    lse = m + jnp.log(jnp.sum(jnp.exp(preds - m), axis=-1, keepdims=True))
    picked = jnp.take_along_axis(preds, labels[:, None].astype(jnp.int32), axis=-1)
    loss = jnp.mean(lse - picked)
    return loss, preds[:, :kparams["num_classes"]]


def reference_forward_f32(inputs, labels, params):
    """Pure-JAX, full-f32 reference matching the PyTorch module's math."""
    B = inputs.shape[0]
    x = inputs.reshape(B, -1).astype(jnp.float32)
    x = (x - x.min()) / (x.max() - x.min())
    h = x @ params["w1"] + params["b1"]
    h = jnp.where(h >= 0.0, h, 0.01 * h)
    preds = h @ params["w2"] + params["b2"]
    logp = jax.nn.log_softmax(preds, axis=-1)
    onehot = jax.nn.one_hot(labels, preds.shape[-1], dtype=jnp.float32)
    loss = -jnp.mean(jnp.sum(onehot * logp, axis=-1))
    return loss, preds


if __name__ == "__main__":
    # Small shapes consistent with the module: input_shape = (B, 4, 16, 16)
    B, C, H, W = 2, 4, 16, 16
    input_size = C * H * W          # 1024
    hidden_units = 32
    output_units = 10

    key = jax.random.PRNGKey(0)
    k_x, k_lbl, k_p = jax.random.split(key, 3)

    x = jax.random.normal(k_x, (B, C, H, W), dtype=jnp.float32)
    labels = jax.random.randint(k_lbl, (B,), 0, output_units, dtype=jnp.int32)

    params = init_params(k_p, input_size, hidden_units, output_units)
    kparams = prepare_params(params)

    loss, preds = label_learner_forward(x, labels, kparams)
    loss = jax.block_until_ready(loss)
    preds = jax.block_until_ready(preds)
    assert preds.shape == (B, output_units)

    # Tight check vs a reference with identical (folded, bf16-matmul) numerics.
    ref_loss_m, ref_preds_m = reference_forward_matched(x, labels, kparams)
    assert jnp.allclose(loss, ref_loss_m, atol=1e-3, rtol=1e-3)
    assert jnp.allclose(preds, ref_preds_m, atol=1e-3, rtol=1e-3)

    # Loose check vs the full-f32 PyTorch-equivalent math (bf16 quantization noise).
    ref_loss, ref_preds = reference_forward_f32(x, labels, params)
    assert jnp.allclose(loss, ref_loss, atol=5e-2, rtol=5e-2)
    assert jnp.allclose(preds, ref_preds, atol=5e-2, rtol=5e-2)

    print("KERNEL_OK")
</pallas_src>

<mosaic_0001>
module attributes {stable_mosaic.version = 11 : i64} {
  func.func @_pass1_kernel(%arg0: i32, %arg1: memref<8x1024xf32, #tpu.memory_space<vmem>>, %arg2: memref<1024x128xbf16, #tpu.memory_space<vmem>>, %arg3: memref<8x128xf32, #tpu.memory_space<vmem>>, %arg4: memref<1x1x1xf32, #tpu.memory_space<vmem>>, %arg5: memref<1x1x1xf32, #tpu.memory_space<vmem>>) attributes {dimension_semantics = [#tpu.dimension_semantics<parallel>], iteration_bounds = array<i64: 1>, scalar_prefetch = 0 : i64, scratch_operands = 0 : i64, tpu.core_type = #tpu.core_type<tc>, window_params = [{transform_indices = @transform_0, window_bounds = array<i64: 8, 1024>}, {pipeline_mode = #tpu.pipeline_mode<synchronous>, transform_indices = @transform_1, window_bounds = array<i64: 1024, 128>}, {transform_indices = @transform_2, window_bounds = array<i64: 8, 128>}, {transform_indices = @transform_3, window_bounds = array<i64: 1, 1, 1>}, {transform_indices = @transform_4, window_bounds = array<i64: 1, 1, 1>}]} {
    %c0 = arith.constant 0 : index
    %c0_0 = arith.constant 0 : index
    %0 = vector.load %arg1[%c0, %c0_0] : memref<8x1024xf32, #tpu.memory_space<vmem>>, vector<8x1024xf32>
    %1 = arith.truncf %0 : vector<8x1024xf32> to vector<8x1024xbf16>
    %c0_1 = arith.constant 0 : index
    %c0_2 = arith.constant 0 : index
    %2 = vector.load %arg2[%c0_1, %c0_2] : memref<1024x128xbf16, #tpu.memory_space<vmem>>, vector<1024x128xbf16>
    %cst = arith.constant dense<0.000000e+00> : vector<8x128xf32>
    %3 = tpu.matmul %1, %2, %cst {dimension_numbers = #tpu.dot_dimension_numbers<[1], [0], [0], [1], [0, 0, 1, 1], [], []>} : vector<8x1024xbf16>, vector<1024x128xbf16>, vector<8x128xf32> -> vector<8x128xf32>
    %c0_3 = arith.constant 0 : index
    %c0_4 = arith.constant 0 : index
    %4 = vector.load %arg3[%c0_3, %c0_4] : memref<8x128xf32, #tpu.memory_space<vmem>>, vector<8x128xf32>
    tpu.vector_store %arg3[%c0_3, %c0_4], %3 {strides = array<i32>} : memref<8x128xf32, #tpu.memory_space<vmem>>, vector<8x128xf32>,
    %5 = tpu.iota {dimensions = array<i32: 0>} : vector<8x1xi32>
    %c8_i32 = arith.constant 8 : i32
    %6 = arith.muli %arg0, %c8_i32 : i32
    %7 = vector.broadcast %6 : i32 to vector<8x1xi32>
    %8 = arith.addi %5, %7 : vector<8x1xi32>
    %c2_i32 = arith.constant 2 : i32
    %9 = vector.broadcast %c2_i32 : i32 to vector<8x1xi32>
    %10 = arith.cmpi slt, %8, %9 : vector<8x1xi32>
    %cst_5 = arith.constant dense<0x7F800000> : vector<8xf32>
    %11 = vector.multi_reduction <minimumf>, %0, %cst_5 [1] : vector<8x1024xf32> to vector<8xf32>
    %12 = vector.shape_cast %11 : vector<8xf32> to vector<8x1xf32>
    %cst_6 = arith.constant 0x7F800000 : f32
    %13 = vector.broadcast %cst_6 : f32 to vector<8x1xf32>
    %14 = arith.select %10, %12, %13 : vector<8x1xi1>, vector<8x1xf32>
    %cst_7 = arith.constant dense<0xFF800000> : vector<8xf32>
    %15 = vector.multi_reduction <maximumf>, %0, %cst_7 [1] : vector<8x1024xf32> to vector<8xf32>
    %16 = vector.shape_cast %15 : vector<8xf32> to vector<8x1xf32>
    %cst_8 = arith.constant 0xFF800000 : f32
    %17 = vector.broadcast %cst_8 : f32 to vector<8x1xf32>
    %18 = arith.select %10, %16, %17 : vector<8x1xi1>, vector<8x1xf32>
    %19 = vector.shape_cast %14 : vector<8x1xf32> to vector<1x8x1xf32>
    %cst_9 = arith.constant dense<0x7F800000> : vector<1xf32>
    %20 = vector.multi_reduction <minimumf>, %19, %cst_9 [1, 2] : vector<1x8x1xf32> to vector<1xf32>
    %21 = vector.shape_cast %20 : vector<1xf32> to vector<1x1x1xf32>
    %22 = vector.extract %21[0, 0, 0] : f32 from vector<1x1x1xf32>
    %23 = vector.broadcast %22 : f32 to vector<1x1x1xf32>
    %c0_10 = arith.constant 0 : index
    %c0_11 = arith.constant 0 : index
    %c0_12 = arith.constant 0 : index
    %24 = vector.load %arg4[%c0_10, %c0_11, %c0_12] : memref<1x1x1xf32, #tpu.memory_space<vmem>>, vector<1x1x1xf32>
    tpu.vector_store %arg4[%c0_10, %c0_11, %c0_12], %23 {strides = array<i32>} : memref<1x1x1xf32, #tpu.memory_space<vmem>>, vector<1x1x1xf32>,
    %25 = vector.shape_cast %18 : vector<8x1xf32> to vector<1x8x1xf32>
    %cst_13 = arith.constant dense<0xFF800000> : vector<1xf32>
    %26 = vector.multi_reduction <maximumf>, %25, %cst_13 [1, 2] : vector<1x8x1xf32> to vector<1xf32>
    %27 = vector.shape_cast %26 : vector<1xf32> to vector<1x1x1xf32>
    %28 = vector.extract %27[0, 0, 0] : f32 from vector<1x1x1xf32>
    %29 = vector.broadcast %28 : f32 to vector<1x1x1xf32>
    %c0_14 = arith.constant 0 : index
    %c0_15 = arith.constant 0 : index
    %c0_16 = arith.constant 0 : index
    %30 = vector.load %arg5[%c0_14, %c0_15, %c0_16] : memref<1x1x1xf32, #tpu.memory_space<vmem>>, vector<1x1x1xf32>
    tpu.vector_store %arg5[%c0_14, %c0_15, %c0_16], %29 {strides = array<i32>} : memref<1x1x1xf32, #tpu.memory_space<vmem>>, vector<1x1x1xf32>,
    return
  }
  func.func @transform_0(%arg0: i32) -> (i32, i32) {
    %c0_i32 = arith.constant 0 : i32
    %c0_i32_0 = arith.constant 0 : i32
    return %arg0, %c0_i32 : i32, i32
  }
  func.func @transform_1(%arg0: i32) -> (i32, i32) {
    %c0_i32 = arith.constant 0 : i32
    %c0_i32_0 = arith.constant 0 : i32
    %c0_i32_1 = arith.constant 0 : i32
    return %c0_i32, %c0_i32_0 : i32, i32
  }
  func.func @transform_2(%arg0: i32) -> (i32, i32) {
    %c0_i32 = arith.constant 0 : i32
    %c0_i32_0 = arith.constant 0 : i32
    return %arg0, %c0_i32 : i32, i32
  }
  func.func @transform_3(%arg0: i32) -> (i32, i32, i32) {
    %c0_i32 = arith.constant 0 : i32
    %c0_i32_0 = arith.constant 0 : i32
    %c0_i32_1 = arith.constant 0 : i32
    return %arg0, %c0_i32, %c0_i32_0 : i32, i32, i32
  }
  func.func @transform_4(%arg0: i32) -> (i32, i32, i32) {
    %c0_i32 = arith.constant 0 : i32
    %c0_i32_0 = arith.constant 0 : i32
    %c0_i32_1 = arith.constant 0 : i32
    return %arg0, %c0_i32, %c0_i32_0 : i32, i32, i32
  }
}

</mosaic_0001>

<llo_original>
// kernel: tpu_custom_call.1
$region0: #{tpu_custom_call.1}
  #allocation0 [shape = 'u32[]', space=smem, size = 0x4, offset = 0x4, fixed_abs, tag = 'smem constant byte address 0x4 - core index']
  #allocation1 [shape = 'u32[72,128]{1,0:T(1,128)}', space=vmem, size = 0x9000, scoped, tag = 'internal scratch']
  %s0 = inlined_call_operand.hbm [shape: f32[2,1024], index: 0, kind: input, shape index: {}]
  %s1 = inlined_call_operand.hbm [shape: bf16[1024,128], index: 1, kind: input, shape index: {}]
  %s2 = inlined_call_operand.hbm [shape: f32[2,128], index: 2, kind: output, shape index: {0}]
  %s3 = inlined_call_operand.hbm [shape: f32[1,1,1], index: 3, kind: output, shape index: {1}]
  %s4 = inlined_call_operand.hbm [shape: f32[1,1,1], index: 4, kind: output, shape index: {2}]
  %5 = xla_tuple %s2, %s3, %s4
  %s6 = sld [smem:[#allocation0]]
  $region42: #{tpu_custom_call.1} parent=0
    _
  %s8 = ssub.s32 1, %s6
  %s9 = scalar_select 0, %s8, %s6
  $region1: #{tpu_custom_call.1} parent=0
    #allocation2 [shape = 'u8[32768]{0}', space=vmem, size = 0x8000, scoped, tag = 'input window, operand 0, single buffered']
    #allocation3 [shape = 's32[1]{0}', space=sflag, size = 0x4, scoped, tag = 'scoped memory for tpu_custom_call.1']
    #allocation4 [shape = 's32[1]{0}', space=sflag, size = 0x4, scoped, tag = 'scoped memory for tpu_custom_call.1']
    #allocation5 [shape = 'u8[262144]{0}', space=vmem, size = 0x40000, scoped, tag = 'input window, operand 1, single buffered']
    #allocation6 [shape = 's32[1]{0}', space=sflag, size = 0x4, scoped, tag = 'scoped memory for tpu_custom_call.1']
    #allocation7 [shape = 'u8[4096]{0}', space=vmem, size = 0x1000, scoped, tag = 'output window, operand 0, single buffered']
    #allocation8 [shape = 'u8[512]{0}', space=vmem, size = 0x400, scoped, tag = 'output window, operand 1, single buffered']
    #allocation9 [shape = 's32[1]{0}', space=sflag, size = 0x4, scoped, tag = 'scoped memory for tpu_custom_call.1']
    #allocation10 [shape = 'u8[512]{0}', space=vmem, size = 0x400, scoped, tag = 'output window, operand 2, single buffered']
    %10 = vsyncpa [#allocation3], 0
    %11 = vsyncpa [#allocation6], 0
    %12 = vsyncpa [#allocation4], 0
    %13 = vsyncpa [#allocation9], 0
    // Predicated region
    $region2: #{tpu_custom_call.1} parent=1 // pred_check
      _
    $region3: #{tpu_custom_call.1} parent=1 // pred_check_branch
      %15 = sbr.rel (0) target = $region5
    $region4: #{tpu_custom_call.1} parent=1 // pred_region
      %17 = vsyncadd [#allocation3], 768
      %s18 = sshll.u32 %s0, 4
      %s19 = int_to_ptr.hbm [resolvable:$true] %s18
      %s20 = sshll.u32 [#allocation2], 4
      %s21 = int_to_ptr.vmem [resolvable:$true] %s20
      %26 = dma.hbm_to_vmem [thread:$0]  %s19, 256, %s21, [#allocation3], 256, 256, 16
    $region5: #{tpu_custom_call.1} parent=1 // pred_fallthru
      _
    // Predicated region
    $region6: #{tpu_custom_call.1} parent=1 // pred_check
      _
    $region7: #{tpu_custom_call.1} parent=1 // pred_check_branch
      %28 = sbr.rel (0) target = $region9
    $region8: #{tpu_custom_call.1} parent=1 // pred_region
      %30 = vsyncadd [#allocation6], 0
      %s31 = sshll.u32 %s1, 4
      %s32 = int_to_ptr.hbm [resolvable:$true] %s31
      %s33 = sshll.u32 [#allocation5], 4
      %s34 = int_to_ptr.vmem [resolvable:$true] %s33
      %39 = dma.hbm_to_vmem [thread:$0]  %s32, 8192, %s34, [#allocation6], 64, 64, 4
    $region9: #{tpu_custom_call.1} parent=1 // pred_fallthru
      _
    // Predicated region
    $region10: #{tpu_custom_call.1} parent=1 // pred_check
      _
    $region11: #{tpu_custom_call.1} parent=1 // pred_check_branch
      %41 = sbr.rel (0) target = $region13
    $region12: #{tpu_custom_call.1} parent=1 // pred_region
      %43 = dma.done [#allocation3], 1024
    $region13: #{tpu_custom_call.1} parent=1 // pred_fallthru
      _
    // Predicated region
    $region14: #{tpu_custom_call.1} parent=1 // pred_check
      _
    $region15: #{tpu_custom_call.1} parent=1 // pred_check_branch
      %45 = sbr.rel (0) target = $region17
    $region16: #{tpu_custom_call.1} parent=1 // pred_region
      %47 = dma.done [#allocation6], 8192
    $region17: #{tpu_custom_call.1} parent=1 // pred_fallthru
      _
    %v48 = vld [vmem:[#allocation2] sm:$0xff]
    %v49 = vld [vmem:[#allocation2 + $0x8] sm:$0xff]
    %v50 = vld [vmem:[#allocation2 + $0x10] sm:$0xff]
    %v51 = vld [vmem:[#allocation2 + $0x18] sm:$0xff]
    %v52 = vld [vmem:[#allocation2 + $0x20] sm:$0xff]
    %v53 = vld [vmem:[#allocation2 + $0x28] sm:$0xff]
    %v54 = vld [vmem:[#allocation2 + $0x30] sm:$0xff]
    %v55 = vld [vmem:[#allocation2 + $0x38] sm:$0xff]
    %64 = vst [vmem:[#allocation1] ss:$4 sm:$0xff] %v48
    %s65 = scalar_lea.vmem [#allocation1], 1
    %66 = vst [vmem:[%s65] ss:$4 sm:$0xff] %v50
    %s67 = scalar_lea.vmem [#allocation1], 2
    %68 = vst [vmem:[%s67] ss:$4 sm:$0xff] %v52
    %s69 = scalar_lea.vmem [#allocation1], 3
    %70 = vst [vmem:[%s69] ss:$4 sm:$0xff] %v54
    %s71 = scalar_lea.vmem [#allocation1], 32
    %72 = vst [vmem:[%s71] ss:$4 sm:$0xff] %v49
    %s73 = scalar_lea.vmem [#allocation1], 33
    %74 = vst [vmem:[%s73] ss:$4 sm:$0xff] %v51
    %s75 = scalar_lea.vmem [#allocation1], 34
    %76 = vst [vmem:[%s75] ss:$4 sm:$0xff] %v53
    %s77 = scalar_lea.vmem [#allocation1], 35
    %78 = vst [vmem:[%s77] ss:$4 sm:$0xff] %v55
    %v79 = vld.sshfl [vmem:[#allocation1] sm:$0xff pattern:$0x73625140]
    %v80 = vld.sshfl [vmem:[#allocation1 + $0x8] sm:$0xff pattern:$0x73625140]
    %v81 = vld.sshfl [vmem:[#allocation1 + $0x10] sm:$0xff pattern:$0x73625140]
    %v82 = vld.sshfl [vmem:[#allocation1 + $0x18] sm:$0xff pattern:$0x73625140]
    %v83 = vld.sshfl [vmem:[#allocation1 + $0x20] sm:$0xff pattern:$0x73625140]
    %v84 = vld.sshfl [vmem:[#allocation1 + $0x28] sm:$0xff pattern:$0x73625140]
    %v85 = vld.sshfl [vmem:[#allocation1 + $0x30] sm:$0xff pattern:$0x73625140]
    %v86 = vld.sshfl [vmem:[#allocation1 + $0x38] sm:$0xff pattern:$0x73625140]
    %v95 = vpack.c.bf16 %v79, %v79
    %v96 = vpack.c.bf16 %v80, %v80
    %v97 = vpack.c.bf16 %v81, %v81
    %v98 = vpack.c.bf16 %v82, %v82
    %v99 = vpack.c.bf16 %v83, %v83
    %v100 = vpack.c.bf16 %v84, %v84
    %v101 = vpack.c.bf16 %v85, %v85
    %v102 = vpack.c.bf16 %v86, %v86
    %v103 = vld [vmem:[#allocation5] sm:$0xf]
    %v104 = vld [vmem:[#allocation5 + $0x4] sm:$0xf]
    %v105 = vld [vmem:[#allocation5 + $0x8] sm:$0xf]
    %v106 = vld [vmem:[#allocation5 + $0xc] sm:$0xf]
    %v107 = vld [vmem:[#allocation5 + $0x10] sm:$0xf]
    %v108 = vld [vmem:[#allocation5 + $0x14] sm:$0xf]
    %v109 = vld [vmem:[#allocation5 + $0x18] sm:$0xf]
    %v110 = vld [vmem:[#allocation5 + $0x1c] sm:$0xf]
    %v111 = vld [vmem:[#allocation5 + $0x20] sm:$0xf]
    %v112 = vld [vmem:[#allocation5 + $0x24] sm:$0xf]
    %v113 = vld [vmem:[#allocation5 + $0x28] sm:$0xf]
    %v114 = vld [vmem:[#allocation5 + $0x2c] sm:$0xf]
    %v115 = vld [vmem:[#allocation5 + $0x30] sm:$0xf]
    %v116 = vld [vmem:[#allocation5 + $0x34] sm:$0xf]
    %v117 = vld [vmem:[#allocation5 + $0x38] sm:$0xf]
    %v118 = vld [vmem:[#allocation5 + $0x3c] sm:$0xf]
    %v119 = vld [vmem:[#allocation5 + $0x40] sm:$0xf]
    %v120 = vld [vmem:[#allocation5 + $0x44] sm:$0xf]
    %v121 = vld [vmem:[#allocation5 + $0x48] sm:$0xf]
    %v122 = vld [vmem:[#allocation5 + $0x4c] sm:$0xf]
    %v123 = vld [vmem:[#allocation5 + $0x50] sm:$0xf]
    %v124 = vld [vmem:[#allocation5 + $0x54] sm:$0xf]
    %v125 = vld [vmem:[#allocation5 + $0x58] sm:$0xf]
    %v126 = vld [vmem:[#allocation5 + $0x5c] sm:$0xf]
    %v127 = vld [vmem:[#allocation5 + $0x60] sm:$0xf]
    %v128 = vld [vmem:[#allocation5 + $0x64] sm:$0xf]
    %v129 = vld [vmem:[#allocation5 + $0x68] sm:$0xf]
    %v130 = vld [vmem:[#allocation5 + $0x6c] sm:$0xf]
    %v131 = vld [vmem:[#allocation5 + $0x70] sm:$0xf]
    %v132 = vld [vmem:[#allocation5 + $0x74] sm:$0xf]
    %v133 = vld [vmem:[#allocation5 + $0x78] sm:$0xf]
    %v134 = vld [vmem:[#allocation5 + $0x7c] sm:$0xf]
    %v135 = vld [vmem:[#allocation5 + $0x80] sm:$0xf]
    %v136 = vld [vmem:[#allocation5 + $0x84] sm:$0xf]
    %v137 = vld [vmem:[#allocation5 + $0x88] sm:$0xf]
    %v138 = vld [vmem:[#allocation5 + $0x8c] sm:$0xf]
    %v139 = vld [vmem:[#allocation5 + $0x90] sm:$0xf]
    %v140 = vld [vmem:[#allocation5 + $0x94] sm:$0xf]
    %v141 = vld [vmem:[#allocation5 + $0x98] sm:$0xf]
    %v142 = vld [vmem:[#allocation5 + $0x9c] sm:$0xf]
    %v143 = vld [vmem:[#allocation5 + $0xa0] sm:$0xf]
    %v144 = vld [vmem:[#allocation5 + $0xa4] sm:$0xf]
    %v145 = vld [vmem:[#allocation5 + $0xa8] sm:$0xf]
    %v146 = vld [vmem:[#allocation5 + $0xac] sm:$0xf]
    %v147 = vld [vmem:[#allocation5 + $0xb0] sm:$0xf]
    %v148 = vld [vmem:[#allocation5 + $0xb4] sm:$0xf]
    %v149 = vld [vmem:[#allocation5 + $0xb8] sm:$0xf]
    %v150 = vld [vmem:[#allocation5 + $0xbc] sm:$0xf]
    %v151 = vld [vmem:[#allocation5 + $0xc0] sm:$0xf]
    %v152 = vld [vmem:[#allocation5 + $0xc4] sm:$0xf]
    %v153 = vld [vmem:[#allocation5 + $0xc8] sm:$0xf]
    %v154 = vld [vmem:[#allocation5 + $0xcc] sm:$0xf]
    %v155 = vld [vmem:[#allocation5 + $0xd0] sm:$0xf]
    %v156 = vld [vmem:[#allocation5 + $0xd4] sm:$0xf]
    %v157 = vld [vmem:[#allocation5 + $0xd8] sm:$0xf]
    %v158 = vld [vmem:[#allocation5 + $0xdc] sm:$0xf]
    %v159 = vld [vmem:[#allocation5 + $0xe0] sm:$0xf]
    %v160 = vld [vmem:[#allocation5 + $0xe4] sm:$0xf]
    %v161 = vld [vmem:[#allocation5 + $0xe8] sm:$0xf]
    %v162 = vld [vmem:[#allocation5 + $0xec] sm:$0xf]
    %v163 = vld [vmem:[#allocation5 + $0xf0] sm:$0xf]
    %v164 = vld [vmem:[#allocation5 + $0xf4] sm:$0xf]
    %v165 = vld [vmem:[#allocation5 + $0xf8] sm:$0xf]
    %v166 = vld [vmem:[#allocation5 + $0xfc] sm:$0xf]
    %v167 = vld [vmem:[#allocation5 + $0x100] sm:$0xf]
    %v168 = vld [vmem:[#allocation5 + $0x104] sm:$0xf]
    %v169 = vld [vmem:[#allocation5 + $0x108] sm:$0xf]
    %v170 = vld [vmem:[#allocation5 + $0x10c] sm:$0xf]
    %v171 = vld [vmem:[#allocation5 + $0x110] sm:$0xf]
    %v172 = vld [vmem:[#allocation5 + $0x114] sm:$0xf]
    %v173 = vld [vmem:[#allocation5 + $0x118] sm:$0xf]
    %v174 = vld [vmem:[#allocation5 + $0x11c] sm:$0xf]
    %v175 = vld [vmem:[#allocation5 + $0x120] sm:$0xf]
    %v176 = vld [vmem:[#allocation5 + $0x124] sm:$0xf]
    %v177 = vld [vmem:[#allocation5 + $0x128] sm:$0xf]
    %v178 = vld [vmem:[#allocation5 + $0x12c] sm:$0xf]
    %v179 = vld [vmem:[#allocation5 + $0x130] sm:$0xf]
    %v180 = vld [vmem:[#allocation5 + $0x134] sm:$0xf]
    %v181 = vld [vmem:[#allocation5 + $0x138] sm:$0xf]
    %v182 = vld [vmem:[#allocation5 + $0x13c] sm:$0xf]
    %v183 = vld [vmem:[#allocation5 + $0x140] sm:$0xf]
    %v184 = vld [vmem:[#allocation5 + $0x144] sm:$0xf]
    %v185 = vld [vmem:[#allocation5 + $0x148] sm:$0xf]
    %v186 = vld [vmem:[#allocation5 + $0x14c] sm:$0xf]
    %v187 = vld [vmem:[#allocation5 + $0x150] sm:$0xf]
    %v188 = vld [vmem:[#allocation5 + $0x154] sm:$0xf]
    %v189 = vld [vmem:[#allocation5 + $0x158] sm:$0xf]
    %v190 = vld [vmem:[#allocation5 + $0x15c] sm:$0xf]
    %v191 = vld [vmem:[#allocation5 + $0x160] sm:$0xf]
    %v192 = vld [vmem:[#allocation5 + $0x164] sm:$0xf]
    %v193 = vld [vmem:[#allocation5 + $0x168] sm:$0xf]
    %v194 = vld [vmem:[#allocation5 + $0x16c] sm:$0xf]
    %v195 = vld [vmem:[#allocation5 + $0x170] sm:$0xf]
    %v196 = vld [vmem:[#allocation5 + $0x174] sm:$0xf]
    %v197 = vld [vmem:[#allocation5 + $0x178] sm:$0xf]
    %v198 = vld [vmem:[#allocation5 + $0x17c] sm:$0xf]
    %v199 = vld [vmem:[#allocation5 + $0x180] sm:$0xf]
    %v200 = vld [vmem:[#allocation5 + $0x184] sm:$0xf]
    %v201 = vld [vmem:[#allocation5 + $0x188] sm:$0xf]
    %v202 = vld [vmem:[#allocation5 + $0x18c] sm:$0xf]
    %v203 = vld [vmem:[#allocation5 + $0x190] sm:$0xf]
    %v204 = vld [vmem:[#allocation5 + $0x194] sm:$0xf]
    %v205 = vld [vmem:[#allocation5 + $0x198] sm:$0xf]
    %v206 = vld [vmem:[#allocation5 + $0x19c] sm:$0xf]
    %v207 = vld [vmem:[#allocation5 + $0x1a0] sm:$0xf]
    %v208 = vld [vmem:[#allocation5 + $0x1a4] sm:$0xf]
    %v209 = vld [vmem:[#allocation5 + $0x1a8] sm:$0xf]
    %v210 = vld [vmem:[#allocation5 + $0x1ac] sm:$0xf]
    %v211 = vld [vmem:[#allocation5 + $0x1b0] sm:$0xf]
    %v212 = vld [vmem:[#allocation5 + $0x1b4] sm:$0xf]
    %v213 = vld [vmem:[#allocation5 + $0x1b8] sm:$0xf]
    %v214 = vld [vmem:[#allocation5 + $0x1bc] sm:$0xf]
    %v215 = vld [vmem:[#allocation5 + $0x1c0] sm:$0xf]
    %v216 = vld [vmem:[#allocation5 + $0x1c4] sm:$0xf]
    %v217 = vld [vmem:[#allocation5 + $0x1c8] sm:$0xf]
    %v218 = vld [vmem:[#allocation5 + $0x1cc] sm:$0xf]
    %v219 = vld [vmem:[#allocation5 + $0x1d0] sm:$0xf]
    %v220 = vld [vmem:[#allocation5 + $0x1d4] sm:$0xf]
    %v221 = vld [vmem:[#allocation5 + $0x1d8] sm:$0xf]
    %v222 = vld [vmem:[#allocation5 + $0x1dc] sm:$0xf]
    %v223 = vld [vmem:[#allocation5 + $0x1e0] sm:$0xf]
    %v224 = vld [vmem:[#allocation5 + $0x1e4] sm:$0xf]
    %v225 = vld [vmem:[#allocation5 + $0x1e8] sm:$0xf]
    %v226 = vld [vmem:[#allocation5 + $0x1ec] sm:$0xf]
    %v227 = vld [vmem:[#allocation5 + $0x1f0] sm:$0xf]
    %v228 = vld [vmem:[#allocation5 + $0x1f4] sm:$0xf]
    %v229 = vld [vmem:[#allocation5 + $0x1f8] sm:$0xf]
    %v230 = vld [vmem:[#allocation5 + $0x1fc] sm:$0xf]
    %v359 = vunpack.c.l.b16 %v103
    %v360 = vunpack.c.l.b16 %v104
    %v361 = vunpack.c.l.b16 %v105
    %v362 = vunpack.c.l.b16 %v106
    %v363 = vunpack.c.l.b16 %v107
    %v364 = vunpack.c.l.b16 %v108
    %v365 = vunpack.c.l.b16 %v109
    %v366 = vunpack.c.l.b16 %v110
    %v367 = vunpack.c.l.b16 %v111
    %v368 = vunpack.c.l.b16 %v112
    %v369 = vunpack.c.l.b16 %v113
    %v370 = vunpack.c.l.b16 %v114
    %v371 = vunpack.c.l.b16 %v115
    %v372 = vunpack.c.l.b16 %v116
    %v373 = vunpack.c.l.b16 %v117
    %v374 = vunpack.c.l.b16 %v118
    %v375 = vunpack.c.l.b16 %v119
    %v376 = vunpack.c.l.b16 %v120
    %v377 = vunpack.c.l.b16 %v121
    %v378 = vunpack.c.l.b16 %v122
    %v379 = vunpack.c.l.b16 %v123
    %v380 = vunpack.c.l.b16 %v124
    %v381 = vunpack.c.l.b16 %v125
    %v382 = vunpack.c.l.b16 %v126
    %v383 = vunpack.c.l.b16 %v127
    %v384 = vunpack.c.l.b16 %v128
    %v385 = vunpack.c.l.b16 %v129
    %v386 = vunpack.c.l.b16 %v130
    %v387 = vunpack.c.l.b16 %v131
    %v388 = vunpack.c.l.b16 %v132
    %v389 = vunpack.c.l.b16 %v133
    %v390 = vunpack.c.l.b16 %v134
    %v391 = vunpack.c.l.b16 %v135
    %v392 = vunpack.c.l.b16 %v136
    %v393 = vunpack.c.l.b16 %v137
    %v394 = vunpack.c.l.b16 %v138
    %v395 = vunpack.c.l.b16 %v139
    %v396 = vunpack.c.l.b16 %v140
    %v397 = vunpack.c.l.b16 %v141
    %v398 = vunpack.c.l.b16 %v142
    %v399 = vunpack.c.l.b16 %v143
    %v400 = vunpack.c.l.b16 %v144
    %v401 = vunpack.c.l.b16 %v145
    %v402 = vunpack.c.l.b16 %v146
    %v403 = vunpack.c.l.b16 %v147
    %v404 = vunpack.c.l.b16 %v148
    %v405 = vunpack.c.l.b16 %v149
    %v406 = vunpack.c.l.b16 %v150
    %v407 = vunpack.c.l.b16 %v151
    %v408 = vunpack.c.l.b16 %v152
    %v409 = vunpack.c.l.b16 %v153
    %v410 = vunpack.c.l.b16 %v154
    %v411 = vunpack.c.l.b16 %v155
    %v412 = vunpack.c.l.b16 %v156
    %v413 = vunpack.c.l.b16 %v157
    %v414 = vunpack.c.l.b16 %v158
    %v415 = vunpack.c.l.b16 %v159
    %v416 = vunpack.c.l.b16 %v160
    %v417 = vunpack.c.l.b16 %v161
    %v418 = vunpack.c.l.b16 %v162
    %v419 = vunpack.c.l.b16 %v163
    %v420 = vunpack.c.l.b16 %v164
    %v421 = vunpack.c.l.b16 %v165
    %v422 = vunpack.c.l.b16 %v166
    %v423 = vunpack.c.l.b16 %v167
    %v424 = vunpack.c.l.b16 %v168
    %v425 = vunpack.c.l.b16 %v169
    %v426 = vunpack.c.l.b16 %v170
    %v427 = vunpack.c.l.b16 %v171
    %v428 = vunpack.c.l.b16 %v172
    %v429 = vunpack.c.l.b16 %v173
    %v430 = vunpack.c.l.b16 %v174
    %v431 = vunpack.c.l.b16 %v175
    %v432 = vunpack.c.l.b16 %v176
    %v433 = vunpack.c.l.b16 %v177
    %v434 = vunpack.c.l.b16 %v178
    %v435 = vunpack.c.l.b16 %v179
    %v436 = vunpack.c.l.b16 %v180
    %v437 = vunpack.c.l.b16 %v181
    %v438 = vunpack.c.l.b16 %v182
    %v439 = vunpack.c.l.b16 %v183
    %v440 = vunpack.c.l.b16 %v184
    %v441 = vunpack.c.l.b16 %v185
    %v442 = vunpack.c.l.b16 %v186
    %v443 = vunpack.c.l.b16 %v187
    %v444 = vunpack.c.l.b16 %v188
    %v445 = vunpack.c.l.b16 %v189
    %v446 = vunpack.c.l.b16 %v190
    %v447 = vunpack.c.l.b16 %v191
    %v448 = vunpack.c.l.b16 %v192
    %v449 = vunpack.c.l.b16 %v193
    %v450 = vunpack.c.l.b16 %v194
    %v451 = vunpack.c.l.b16 %v195
    %v452 = vunpack.c.l.b16 %v196
    %v453 = vunpack.c.l.b16 %v197
    %v454 = vunpack.c.l.b16 %v198
    %v455 = vunpack.c.l.b16 %v199
    %v456 = vunpack.c.l.b16 %v200
    %v457 = vunpack.c.l.b16 %v201
    %v458 = vunpack.c.l.b16 %v202
    %v459 = vunpack.c.l.b16 %v203
    %v460 = vunpack.c.l.b16 %v204
    %v461 = vunpack.c.l.b16 %v205
    %v462 = vunpack.c.l.b16 %v206
    %v463 = vunpack.c.l.b16 %v207
    %v464 = vunpack.c.l.b16 %v208
    %v465 = vunpack.c.l.b16 %v209
    %v466 = vunpack.c.l.b16 %v210
    %v467 = vunpack.c.l.b16 %v211
    %v468 = vunpack.c.l.b16 %v212
    %v469 = vunpack.c.l.b16 %v213
    %v470 = vunpack.c.l.b16 %v214
    %v471 = vunpack.c.l.b16 %v215
    %v472 = vunpack.c.l.b16 %v216
    %v473 = vunpack.c.l.b16 %v217
    %v474 = vunpack.c.l.b16 %v218
    %v475 = vunpack.c.l.b16 %v219
    %v476 = vunpack.c.l.b16 %v220
    %v477 = vunpack.c.l.b16 %v221
    %v478 = vunpack.c.l.b16 %v222
    %v479 = vunpack.c.l.b16 %v223
    %v480 = vunpack.c.l.b16 %v224
    %v481 = vunpack.c.l.b16 %v225
    %v482 = vunpack.c.l.b16 %v226
    %v483 = vunpack.c.l.b16 %v227
    %v484 = vunpack.c.l.b16 %v228
    %v485 = vunpack.c.l.b16 %v229
    %v486 = vunpack.c.l.b16 %v230
    %v487 = vpack.c.b16 %v360, %v359
    %v488 = vpack.c.b16 %v362, %v361
    %v489 = vpack.c.b16 %v364, %v363
    %v490 = vpack.c.b16 %v366, %v365
    %v491 = vpack.c.b16 %v368, %v367
    %v492 = vpack.c.b16 %v370, %v369
    %v493 = vpack.c.b16 %v372, %v371
    %v494 = vpack.c.b16 %v374, %v373
    %v495 = vpack.c.b16 %v376, %v375
    %v496 = vpack.c.b16 %v378, %v377
    %v497 = vpack.c.b16 %v380, %v379
    %v498 = vpack.c.b16 %v382, %v381
    %v499 = vpack.c.b16 %v384, %v383
    %v500 = vpack.c.b16 %v386, %v385
    %v501 = vpack.c.b16 %v388, %v387
    %v502 = vpack.c.b16 %v390, %v389
    %v503 = vpack.c.b16 %v392, %v391
    %v504 = vpack.c.b16 %v394, %v393
    %v505 = vpack.c.b16 %v396, %v395
    %v506 = vpack.c.b16 %v398, %v397
    %v507 = vpack.c.b16 %v400, %v399
    %v508 = vpack.c.b16 %v402, %v401
    %v509 = vpack.c.b16 %v404, %v403
    %v510 = vpack.c.b16 %v406, %v405
    %v511 = vpack.c.b16 %v408, %v407
    %v512 = vpack.c.b16 %v410, %v409
    %v513 = vpack.c.b16 %v412, %v411
    %v514 = vpack.c.b16 %v414, %v413
    %v515 = vpack.c.b16 %v416, %v415
    %v516 = vpack.c.b16 %v418, %v417
    %v517 = vpack.c.b16 %v420, %v419
    %v518 = vpack.c.b16 %v422, %v421
    %v519 = vpack.c.b16 %v424, %v423
    %v520 = vpack.c.b16 %v426, %v425
    %v521 = vpack.c.b16 %v428, %v427
    %v522 = vpack.c.b16 %v430, %v429
    %v523 = vpack.c.b16 %v432, %v431
    %v524 = vpack.c.b16 %v434, %v433
    %v525 = vpack.c.b16 %v436, %v435
    %v526 = vpack.c.b16 %v438, %v437
    %v527 = vpack.c.b16 %v440, %v439
    %v528 = vpack.c.b16 %v442, %v441
    %v529 = vpack.c.b16 %v444, %v443
    %v530 = vpack.c.b16 %v446, %v445
    %v531 = vpack.c.b16 %v448, %v447
    %v532 = vpack.c.b16 %v450, %v449
    %v533 = vpack.c.b16 %v452, %v451
    %v534 = vpack.c.b16 %v454, %v453
    %v535 = vpack.c.b16 %v456, %v455
    %v536 = vpack.c.b16 %v458, %v457
    %v537 = vpack.c.b16 %v460, %v459
    %v538 = vpack.c.b16 %v462, %v461
    %v539 = vpack.c.b16 %v464, %v463
    %v540 = vpack.c.b16 %v466, %v465
    %v541 = vpack.c.b16 %v468, %v467
    %v542 = vpack.c.b16 %v470, %v469
    %v543 = vpack.c.b16 %v472, %v471
    %v544 = vpack.c.b16 %v474, %v473
    %v545 = vpack.c.b16 %v476, %v475
    %v546 = vpack.c.b16 %v478, %v477
    %v547 = vpack.c.b16 %v480, %v479
    %v548 = vpack.c.b16 %v482, %v481
    %v549 = vpack.c.b16 %v484, %v483
    %v550 = vpack.c.b16 %v486, %v485
    %615 = vmatpush.bf16.msra.mxu0 %v494
    %616 = vmatpush.bf16.msra.mxu0 %v493
    %617 = vmatpush.bf16.msra.mxu0 %v492
    %618 = vmatpush.bf16.msra.mxu0 %v491
    %619 = vmatpush.bf16.msra.mxu0 %v490
    %620 = vmatpush.bf16.msra.mxu0 %v489
    %621 = vmatpush.bf16.msra.mxu0 %v488
    %622 = vmatpush.bf16.msra.mxu0 %v487
    %623 = vmatmul.bf16.gmra.mxu0 %v95
    %v624 = vpop.f32.mrf.mxu0
    %v625 = vadd.f32 0.0, %v624
    %v626 = vpop.f32.mrf.mxu0
    %627 = vdwg.mxu0
    %628 = vmatpush.bf16.msra.mxu0 %v502
    %629 = vmatpush.bf16.msra.mxu0 %v501
    %630 = vmatpush.bf16.msra.mxu0 %v500
    %631 = vmatpush.bf16.msra.mxu0 %v499
    %632 = vmatpush.bf16.msra.mxu0 %v498
    %633 = vmatpush.bf16.msra.mxu0 %v497
    %634 = vmatpush.bf16.msra.mxu0 %v496
    %635 = vmatpush.bf16.msra.mxu0 %v495
    %636 = vmatmul.bf16.gmra.mxu0 %v96
    %v637 = vpop.f32.mrf.mxu0
    %v638 = vadd.f32 %v625, %v637
    %v639 = vpop.f32.mrf.mxu0
    %640 = vdwg.mxu0
    %641 = vmatpush.bf16.msra.mxu0 %v510
    %642 = vmatpush.bf16.msra.mxu0 %v509
    %643 = vmatpush.bf16.msra.mxu0 %v508
    %644 = vmatpush.bf16.msra.mxu0 %v507
    %645 = vmatpush.bf16.msra.mxu0 %v506
    %646 = vmatpush.bf16.msra.mxu0 %v505
    %647 = vmatpush.bf16.msra.mxu0 %v504
    %648 = vmatpush.bf16.msra.mxu0 %v503
    %649 = vmatmul.bf16.gmra.mxu0 %v97
    %v650 = vpop.f32.mrf.mxu0
    %v651 = vadd.f32 %v638, %v650
    %v652 = vpop.f32.mrf.mxu0
    %653 = vdwg.mxu0
    %654 = vmatpush.bf16.msra.mxu0 %v518
    %655 = vmatpush.bf16.msra.mxu0 %v517
    %656 = vmatpush.bf16.msra.mxu0 %v516
    %657 = vmatpush.bf16.msra.mxu0 %v515
    %658 = vmatpush.bf16.msra.mxu0 %v514
    %659 = vmatpush.bf16.msra.mxu0 %v513
    %660 = vmatpush.bf16.msra.mxu0 %v512
    %661 = vmatpush.bf16.msra.mxu0 %v511
    %662 = vmatmul.bf16.gmra.mxu0 %v98
    %v663 = vpop.f32.mrf.mxu0
    %v664 = vadd.f32 %v651, %v663
    %v665 = vpop.f32.mrf.mxu0
    %666 = vdwg.mxu0
    %667 = vmatpush.bf16.msra.mxu0 %v526
    %668 = vmatpush.bf16.msra.mxu0 %v525
    %669 = vmatpush.bf16.msra.mxu0 %v524
    %670 = vmatpush.bf16.msra.mxu0 %v523
    %671 = vmatpush.bf16.msra.mxu0 %v522
    %672 = vmatpush.bf16.msra.mxu0 %v521
    %673 = vmatpush.bf16.msra.mxu0 %v520
    %674 = vmatpush.bf16.msra.mxu0 %v519
    %675 = vmatmul.bf16.gmra.mxu0 %v99
    %v676 = vpop.f32.mrf.mxu0
    %v677 = vadd.f32 %v664, %v676
    %v678 = vpop.f32.mrf.mxu0
    %679 = vdwg.mxu0
    %680 = vmatpush.bf16.msra.mxu0 %v534
    %681 = vmatpush.bf16.msra.mxu0 %v533
    %682 = vmatpush.bf16.msra.mxu0 %v532
    %683 = vmatpush.bf16.msra.mxu0 %v531
    %684 = vmatpush.bf16.msra.mxu0 %v530
    %685 = vmatpush.bf16.msra.mxu0 %v529
    %686 = vmatpush.bf16.msra.mxu0 %v528
    %687 = vmatpush.bf16.msra.mxu0 %v527
    %688 = vmatmul.bf16.gmra.mxu0 %v100
    %v689 = vpop.f32.mrf.mxu0
    %v690 = vadd.f32 %v677, %v689
    %v691 = vpop.f32.mrf.mxu0
    %692 = vdwg.mxu0
    %693 = vmatpush.bf16.msra.mxu0 %v542
    %694 = vmatpush.bf16.msra.mxu0 %v541
    %695 = vmatpush.bf16.msra.mxu0 %v540
    %696 = vmatpush.bf16.msra.mxu0 %v539
    %697 = vmatpush.bf16.msra.mxu0 %v538
    %698 = vmatpush.bf16.msra.mxu0 %v537
    %699 = vmatpush.bf16.msra.mxu0 %v536
    %700 = vmatpush.bf16.msra.mxu0 %v535
    %701 = vmatmul.bf16.gmra.mxu0 %v101
    %v702 = vpop.f32.mrf.mxu0
    %v703 = vadd.f32 %v690, %v702
    %v704 = vpop.f32.mrf.mxu0
    %705 = vdwg.mxu0
    %706 = vmatpush.bf16.msra.mxu0 %v550
    %707 = vmatpush.bf16.msra.mxu0 %v549
    %708 = vmatpush.bf16.msra.mxu0 %v548
    %709 = vmatpush.bf16.msra.mxu0 %v547
    %710 = vmatpush.bf16.msra.mxu0 %v546
    %711 = vmatpush.bf16.msra.mxu0 %v545
    %712 = vmatpush.bf16.msra.mxu0 %v544
    %713 = vmatpush.bf16.msra.mxu0 %v543
    %714 = vmatmul.bf16.gmra.mxu0 %v102
    %v715 = vpop.f32.mrf.mxu0
    %v716 = vadd.f32 %v703, %v715
    %v717 = vpop.f32.mrf.mxu0
    %718 = vdwg.mxu0
    %719 = vst [vmem:[#allocation7] sm:$0xff] %v716
    %v720 = vlaneseq
    %v721 = vshrl.u32 %v720, 7
    %s722 = smul.u32 0, 8
    %v723 = vstv %s722
    %v724 = vadd.s32 %v721, %v723
    %vm725 = vcmp.lt.s32.totalorder %v724, 2
    %726 = vst [vmem:[#allocation1] ss:$4 sm:$0xff] %v48
    %s727 = scalar_lea.vmem [#allocation1], 1
    %728 = vst [vmem:[%s727] ss:$4 sm:$0xff] %v50
    %s729 = scalar_lea.vmem [#allocation1], 2
    %730 = vst [vmem:[%s729] ss:$4 sm:$0xff] %v52
    %s731 = scalar_lea.vmem [#allocation1], 3
    %732 = vst [vmem:[%s731] ss:$4 sm:$0xff] %v54
    %s733 = scalar_lea.vmem [#allocation1], 32
    %734 = vst [vmem:[%s733] ss:$4 sm:$0xff] %v49
    %s735 = scalar_lea.vmem [#allocation1], 33
    %736 = vst [vmem:[%s735] ss:$4 sm:$0xff] %v51
    %s737 = scalar_lea.vmem [#allocation1], 34
    %738 = vst [vmem:[%s737] ss:$4 sm:$0xff] %v53
    %s739 = scalar_lea.vmem [#allocation1], 35
    %740 = vst [vmem:[%s739] ss:$4 sm:$0xff] %v55
    %v741 = vld.sshfl [vmem:[#allocation1] sm:$0xff pattern:$0x73625140]
    %v742 = vld.sshfl [vmem:[#allocation1 + $0x8] sm:$0xff pattern:$0x73625140]
    %v743 = vld.sshfl [vmem:[#allocation1 + $0x10] sm:$0xff pattern:$0x73625140]
    %v744 = vld.sshfl [vmem:[#allocation1 + $0x18] sm:$0xff pattern:$0x73625140]
    %v745 = vld.sshfl [vmem:[#allocation1 + $0x20] sm:$0xff pattern:$0x73625140]
    %v746 = vld.sshfl [vmem:[#allocation1 + $0x28] sm:$0xff pattern:$0x73625140]
    %v747 = vld.sshfl [vmem:[#allocation1 + $0x30] sm:$0xff pattern:$0x73625140]
    %v748 = vld.sshfl [vmem:[#allocation1 + $0x38] sm:$0xff pattern:$0x73625140]
    %v757 = vmin.f32 %v741, %v745
    %v758 = vmin.f32 %v742, %v746
    %v759 = vmin.f32 %v743, %v747
    %v760 = vmin.f32 %v744, %v748
    %v761 = vmin.f32 %v757, %v758
    %v762 = vmin.f32 %v759, %v760
    %v763 = vmin.f32 %v761, %v762
    %764 = vmin.xlane.f32.xlu0 %v763
    %v765 = vpop.xlane.xlu0 %764
    %v766 = vsel %vm725, %v765, inf
    %767 = vst [vmem:[#allocation1] ss:$4 sm:$0xff] %v48
    %s768 = scalar_lea.vmem [#allocation1], 1
    %769 = vst [vmem:[%s768] ss:$4 sm:$0xff] %v50
    %s770 = scalar_lea.vmem [#allocation1], 2
    %771 = vst [vmem:[%s770] ss:$4 sm:$0xff] %v52
    %s772 = scalar_lea.vmem [#allocation1], 3
    %773 = vst [vmem:[%s772] ss:$4 sm:$0xff] %v54
    %s774 = scalar_lea.vmem [#allocation1], 32
    %775 = vst [vmem:[%s774] ss:$4 sm:$0xff] %v49
    %s776 = scalar_lea.vmem [#allocation1], 33
    %777 = vst [vmem:[%s776] ss:$4 sm:$0xff] %v51
    %s778 = scalar_lea.vmem [#allocation1], 34
    %779 = vst [vmem:[%s778] ss:$4 sm:$0xff] %v53
    %s780 = scalar_lea.vmem [#allocation1], 35
    %781 = vst [vmem:[%s780] ss:$4 sm:$0xff] %v55
    %v782 = vld.sshfl [vmem:[#allocation1] sm:$0xff pattern:$0x73625140]
    %v783 = vld.sshfl [vmem:[#allocation1 + $0x8] sm:$0xff pattern:$0x73625140]
    %v784 = vld.sshfl [vmem:[#allocation1 + $0x10] sm:$0xff pattern:$0x73625140]
    %v785 = vld.sshfl [vmem:[#allocation1 + $0x18] sm:$0xff pattern:$0x73625140]
    %v786 = vld.sshfl [vmem:[#allocation1 + $0x20] sm:$0xff pattern:$0x73625140]
    %v787 = vld.sshfl [vmem:[#allocation1 + $0x28] sm:$0xff pattern:$0x73625140]
    %v788 = vld.sshfl [vmem:[#allocation1 + $0x30] sm:$0xff pattern:$0x73625140]
    %v789 = vld.sshfl [vmem:[#allocation1 + $0x38] sm:$0xff pattern:$0x73625140]
    %v798 = vmax.f32 %v782, %v786
    %v799 = vmax.f32 %v783, %v787
    %v800 = vmax.f32 %v784, %v788
    %v801 = vmax.f32 %v785, %v789
    %v802 = vmax.f32 %v798, %v799
    %v803 = vmax.f32 %v800, %v801
    %v804 = vmax.f32 %v802, %v803
    %805 = vmax.xlane.f32.xlu0 %v804
    %v806 = vpop.xlane.xlu0 %805
    %v807 = vsel %vm725, %v806, -inf
    %v808 = vrot.slane %v766, 4
    %v809 = vmin.f32 %v766, %v808
    %v810 = vrot.slane %v809, 2
    %v811 = vmin.f32 %v809, %v810
    %v812 = vrot.slane %v811, 1
    %v813 = vmin.f32 %v811, %v812
    %s814 = vtos %v813
    %v815 = vstv %s814
    %vm816 = vcmask 0
    %817 = vst.msk [vmem:[#allocation8] sm:$0x1] %vm816, %v815
    %v818 = vrot.slane %v807, 4
    %v819 = vmax.f32 %v807, %v818
    %v820 = vrot.slane %v819, 2
    %v821 = vmax.f32 %v819, %v820
    %v822 = vrot.slane %v821, 1
    %v823 = vmax.f32 %v821, %v822
    %s824 = vtos %v823
    %v825 = vstv %s824
    %826 = vst.msk [vmem:[#allocation10] sm:$0x1] %vm816, %v825
    // Predicated region
    $region18: #{tpu_custom_call.1} parent=1 // pred_check
      _
    $region19: #{tpu_custom_call.1} parent=1 // pred_check_branch
      %828 = sbr.rel (0) target = $region21
    $region20: #{tpu_custom_call.1} parent=1 // pred_region
      %830 = vsyncadd [#allocation4], 96
      %s831 = sshll.u32 [#allocation7], 4
      %s832 = int_to_ptr.vmem [resolvable:$true] %s831
      %s833 = sshll.u32 %s2, 4
      %s834 = int_to_ptr.hbm [resolvable:$true] %s833
      %839 = dma.vmem_to_hbm [thread:$0]  %s832, 32, %s834, [#allocation4], 32, 32, 2
    $region21: #{tpu_custom_call.1} parent=1 // pred_fallthru
      _
    // Predicated region
    $region22: #{tpu_custom_call.1} parent=1 // pred_check
      _
    $region23: #{tpu_custom_call.1} parent=1 // pred_check_branch
      %841 = sbr.rel (0) target = $region25
    $region24: #{tpu_custom_call.1} parent=1 // pred_region
      %843 = vsyncadd [#allocation9], 0
      %s845 = sshll.u32 [#allocation8], 4
      %s846 = int_to_ptr.vmem [resolvable:$true] %s845
      %s847 = sshll.u32 %s3, 4
      %s848 = int_to_ptr.hbm [resolvable:$true] %s847
      %850 = dma.vmem_to_hbm [thread:$0]  %s846, 16, %s848, [#allocation9]
    $region25: #{tpu_custom_call.1} parent=1 // pred_fallthru
      _
    // Predicated region
    $region26: #{tpu_custom_call.1} parent=1 // pred_check
      _
    $region27: #{tpu_custom_call.1} parent=1 // pred_check_branch
      %852 = sbr.rel (0) target = $region29
    $region28: #{tpu_custom_call.1} parent=1 // pred_region
      %854 = vsyncadd [#allocation9], 0
      %s856 = sshll.u32 [#allocation10], 4
      %s857 = int_to_ptr.vmem [resolvable:$true] %s856
      %s858 = sshll.u32 %s4, 4
      %s859 = int_to_ptr.hbm [resolvable:$true] %s858
      %861 = dma.vmem_to_hbm [thread:$0]  %s857, 16, %s859, [#allocation9]
    $region29: #{tpu_custom_call.1} parent=1 // pred_fallthru
      _
    // Predicated region
    $region30: #{tpu_custom_call.1} parent=1 // pred_check
      _
    $region31: #{tpu_custom_call.1} parent=1 // pred_check_branch
      %863 = sbr.rel (0) target = $region33
    $region32: #{tpu_custom_call.1} parent=1 // pred_region
      %865 = dma.done [#allocation4], 128
    $region33: #{tpu_custom_call.1} parent=1 // pred_fallthru
      _
    // Predicated region
    $region34: #{tpu_custom_call.1} parent=1 // pred_check
      _
    $region35: #{tpu_custom_call.1} parent=1 // pred_check_branch
      %867 = sbr.rel (0) target = $region37
    $region36: #{tpu_custom_call.1} parent=1 // pred_region
      %869 = dma.done [#allocation9], 16
    $region37: #{tpu_custom_call.1} parent=1 // pred_fallthru
      _
    // Predicated region
    $region38: #{tpu_custom_call.1} parent=1 // pred_check
      _
    $region39: #{tpu_custom_call.1} parent=1 // pred_check_branch
      %871 = sbr.rel (0) target = $region41
    $region40: #{tpu_custom_call.1} parent=1 // pred_region
      %873 = dma.done [#allocation9], 16
    $region41: #{tpu_custom_call.1} parent=1 // pred_fallthru
      _
    %874 = vsyncpa [#allocation3], 1
    %875 = vsyncpa [#allocation6], 1
    %876 = vsyncpa [#allocation4], 1
    %877 = vsyncpa [#allocation9], 1

</llo_original>
